<compile_context>
chip_gen: v6e
topology: v6e:2x2x1
jax: 0.10.0
libtpu: 0.0.40
codegen_flags: <defaults>
</compile_context>

<pallas_src>
import functools

import jax
import jax.numpy as jnp
from jax.experimental import pallas as pl
from jax.experimental.pallas import tpu as pltpu

EPS = 1e-5
_LANES = 128
_TC_MAX = 8192        # lane-width cap per channel tile
_TN_MAX = 1024        # row-tile cap for the two-pass path


# --------------------------------------------------------------------------
# Hardware-aware sizing
# --------------------------------------------------------------------------
def _vmem_config():
    """Returns (vmem_limit_bytes, per-block tile budget, want_multi_tile)."""
    try:
        cap = int(pltpu.get_tpu_info().vmem_capacity_bytes)
    except Exception:
        cap = 0
    if cap >= (100 << 20):
        # v5e / v6e: 128 MiB physical VMEM, single TensorCore.
        return 64 << 20, 48 << 20, False
    if cap > 0:
        # v7x-like: 64 MiB per TC, 2 TCs -> cap limit, force >=2 channel tiles.
        limit = min(48 << 20, int(cap * 0.75))
        return limit, int(limit * 0.66), True
    # Unknown hardware: conservative defaults, safe everywhere.
    return 32 << 20, 16 << 20, True


def _bounded_tc(c, tc_budget, multi_tile):
    """Channel tile width (multiple of 128, <= c) for c >= 128."""
    c_floor = (c // _LANES) * _LANES                       # largest 128-mult <= c
    budget = max(_LANES, (tc_budget // _LANES) * _LANES)
    tc = max(_LANES, min(c_floor, _TC_MAX, budget))
    if multi_tile and c_floor >= 2 * _LANES:
        # Guarantee >=2 channel tiles so the "parallel" axis shards across TCs.
        tc = max(_LANES, min(tc, ((c_floor // 2) // _LANES) * _LANES))
    return tc


def _pick_tile_c_single(n, c, itemsize, tile_budget, multi_tile):
    if c <= _LANES:
        return c                                            # full-dim block
    per_lane = n * (4 * itemsize + 4)                       # in/out dbl-buffered + f32 temp headroom
    return _bounded_tc(c, tile_budget // max(per_lane, 1), multi_tile)


def _pick_tile_n(n):
    if n <= 8:
        return n                                            # full-dim block
    return max(8, (min(n, _TN_MAX) // 8) * 8)


def _pick_tile_c_two_pass(tn, c, itemsize, tile_budget, multi_tile):
    if c <= _LANES:
        return c
    per_lane = tn * (4 * itemsize + 4)
    return _bounded_tc(c, tile_budget // max(per_lane, 1), multi_tile)


def _pad_params(gamma, beta, c, c_padded):
    g = gamma.astype(jnp.float32)
    b = beta.astype(jnp.float32)
    if c_padded != c:
        g = jnp.pad(g, (0, c_padded - c), constant_values=1.0)  # benign lanes
        b = jnp.pad(b, (0, c_padded - c))
    return g.reshape(1, c_padded), b.reshape(1, c_padded)


# --------------------------------------------------------------------------
# Single-pass kernel: full batch resident per channel tile
# --------------------------------------------------------------------------
def _bn1d_kernel(x_ref, gamma_ref, beta_ref, o_ref):
    n = x_ref.shape[0]
    inv_n = jnp.float32(1.0 / n)

    # Phase 1 (VMEM re-stream): mean.
    mean = jnp.sum(x_ref[...].astype(jnp.float32), axis=0, keepdims=True) * inv_n

    # Phase 2 (VMEM re-stream): centered variance (numerically safer than
    # E[x^2]-E[x]^2; hides under the memory bound).
    centered = x_ref[...].astype(jnp.float32) - mean
    var = jnp.sum(centered * centered, axis=0, keepdims=True) * inv_n
    inv_std = jax.lax.rsqrt(var + EPS)

    # Fold normalization + affine into one multiply-add per element.
    scale = inv_std * gamma_ref[...]
    shift = beta_ref[...] - mean * scale

    # Phase 3 (VMEM re-stream): apply.
    o_ref[...] = (x_ref[...].astype(jnp.float32) * scale + shift).astype(o_ref.dtype)


def _bn1d_single_pass(x, gamma, beta, n, c, itemsize, vmem_limit, tile_budget,
                      multi_tile):
    tc = _pick_tile_c_single(n, c, itemsize, tile_budget, multi_tile)
    n_c_tiles = pl.cdiv(c, tc)
    gamma2d, beta2d = _pad_params(gamma, beta, c, n_c_tiles * tc)

    return pl.pallas_call(
        _bn1d_kernel,
        out_shape=jax.ShapeDtypeStruct((n, c), x.dtype),
        grid_spec=pltpu.PrefetchScalarGridSpec(
            num_scalar_prefetch=0,
            grid=(n_c_tiles,),
            in_specs=[
                pl.BlockSpec((n, tc), lambda j: (0, j)),
                pl.BlockSpec((1, tc), lambda j: (0, j)),
                pl.BlockSpec((1, tc), lambda j: (0, j)),
            ],
            out_specs=pl.BlockSpec((n, tc), lambda j: (0, j)),
        ),
        compiler_params=pltpu.CompilerParams(
            dimension_semantics=("parallel",),
            vmem_limit_bytes=vmem_limit,
        ),
    )(x, gamma2d, beta2d)


# --------------------------------------------------------------------------
# Two-pass fallback for large N: stats pass (resident accumulator) + apply pass
# --------------------------------------------------------------------------
def _bn1d_stats_kernel(x_ref, gamma_ref, beta_ref, scale_ref, shift_ref,
                       s_acc, ss_acc, *, n_total, tn):
    i = pl.program_id(1)  # batch-tile index (reduction axis, last in grid)

    @pl.when(i == 0)
    def _():
        s_acc[...] = jnp.zeros_like(s_acc)
        ss_acc[...] = jnp.zeros_like(ss_acc)

    x = x_ref[...].astype(jnp.float32)
    if n_total % tn != 0:
        # Mask garbage rows of the ragged last batch tile out of the sums.
        row = jax.lax.broadcasted_iota(jnp.int32, x.shape, 0) + i * tn
        x = jnp.where(row < n_total, x, 0.0)
    s_acc[...] += jnp.sum(x, axis=0, keepdims=True)
    ss_acc[...] += jnp.sum(x * x, axis=0, keepdims=True)

    @pl.when(i == pl.num_programs(1) - 1)
    def _():
        inv_n = jnp.float32(1.0 / n_total)
        mean = s_acc[...] * inv_n
        var = jnp.maximum(ss_acc[...] * inv_n - mean * mean, 0.0)
        inv_std = jax.lax.rsqrt(var + EPS)
        scale = inv_std * gamma_ref[...]
        scale_ref[...] = scale
        shift_ref[...] = beta_ref[...] - mean * scale


def _bn1d_apply_kernel(x_ref, scale_ref, shift_ref, o_ref):
    o_ref[...] = (x_ref[...].astype(jnp.float32) * scale_ref[...]
                  + shift_ref[...]).astype(o_ref.dtype)


def _bn1d_two_pass(x, gamma, beta, n, c, itemsize, vmem_limit, tile_budget,
                   multi_tile):
    tn = _pick_tile_n(n)
    tc = _pick_tile_c_two_pass(tn, c, itemsize, tile_budget, multi_tile)
    n_n_tiles = pl.cdiv(n, tn)
    n_c_tiles = pl.cdiv(c, tc)
    c_padded = n_c_tiles * tc
    gamma2d, beta2d = _pad_params(gamma, beta, c, c_padded)

    stats_kernel = functools.partial(_bn1d_stats_kernel, n_total=n, tn=tn)
    scale2d, shift2d = pl.pallas_call(
        stats_kernel,
        out_shape=(jax.ShapeDtypeStruct((1, c_padded), jnp.float32),
                   jax.ShapeDtypeStruct((1, c_padded), jnp.float32)),
        grid_spec=pltpu.PrefetchScalarGridSpec(
            num_scalar_prefetch=0,
            grid=(n_c_tiles, n_n_tiles),
            in_specs=[
                pl.BlockSpec((tn, tc), lambda j, i: (i, j)),
                pl.BlockSpec((1, tc), lambda j, i: (0, j)),
                pl.BlockSpec((1, tc), lambda j, i: (0, j)),
            ],
            out_specs=(pl.BlockSpec((1, tc), lambda j, i: (0, j)),
                       pl.BlockSpec((1, tc), lambda j, i: (0, j))),
            scratch_shapes=[pltpu.VMEM((1, tc), jnp.float32),
                            pltpu.VMEM((1, tc), jnp.float32)],
        ),
        compiler_params=pltpu.CompilerParams(
            dimension_semantics=("parallel", "arbitrary"),
            vmem_limit_bytes=vmem_limit,
        ),
    )(x, gamma2d, beta2d)

    return pl.pallas_call(
        _bn1d_apply_kernel,
        out_shape=jax.ShapeDtypeStruct((n, c), x.dtype),
        grid_spec=pltpu.PrefetchScalarGridSpec(
            num_scalar_prefetch=0,
            grid=(n_n_tiles, n_c_tiles),
            in_specs=[
                pl.BlockSpec((tn, tc), lambda i, j: (i, j)),
                pl.BlockSpec((1, tc), lambda i, j: (0, j)),
                pl.BlockSpec((1, tc), lambda i, j: (0, j)),
            ],
            out_specs=pl.BlockSpec((tn, tc), lambda i, j: (i, j)),
        ),
        compiler_params=pltpu.CompilerParams(
            dimension_semantics=("parallel", "parallel"),
            vmem_limit_bytes=vmem_limit,
        ),
    )(x, scale2d, shift2d)


# --------------------------------------------------------------------------
# Public wrapper (mirrors the PyTorch module's view(-1, dim) semantics)
# --------------------------------------------------------------------------
def batch_norm_1d(x, gamma, beta, *, force_two_pass=False):
    """Training-mode batch norm over the batch axis. gamma/beta: (C,)."""
    c = gamma.shape[0]
    orig_shape = x.shape
    x2 = x.reshape(-1, c)
    n = x2.shape[0]
    itemsize = jnp.dtype(x2.dtype).itemsize

    vmem_limit, tile_budget, multi_tile = _vmem_config()
    # Single-pass needs the full-batch (N, 128) in/out tiles (double-buffered)
    # to fit the per-block budget; otherwise fall back to the two-pass path.
    single_ok = (not force_two_pass) and (
        n * (4 * itemsize + 4) * _LANES <= tile_budget)

    if single_ok:
        out = _bn1d_single_pass(x2, gamma, beta, n, c, itemsize, vmem_limit,
                                tile_budget, multi_tile)
    else:
        out = _bn1d_two_pass(x2, gamma, beta, n, c, itemsize, vmem_limit,
                             tile_budget, multi_tile)
    return out.reshape(orig_shape)


def _reference(x, gamma, beta):
    mean = jnp.mean(x, axis=0, keepdims=True)
    var = jnp.mean((x - mean) ** 2, axis=0, keepdims=True)
    return (x - mean) / jnp.sqrt(var + EPS) * gamma + beta


if __name__ == "__main__":
    key = jax.random.PRNGKey(0)

    # --- Test 1: module defaults (gamma=1, beta=0), single-pass path -------
    N, DIM = 16, 32
    k1, k2, k3, k4 = jax.random.split(key, 4)
    x = jax.random.normal(k1, (N, DIM), dtype=jnp.float32) * 2.0 + 0.5
    gamma = jnp.ones((DIM,), dtype=jnp.float32)
    beta = jnp.zeros((DIM,), dtype=jnp.float32)

    out = jax.block_until_ready(batch_norm_1d(x, gamma, beta))
    ref = _reference(x, gamma, beta)
    assert out.shape == (N, DIM)
    assert jnp.allclose(out, ref, atol=1e-5, rtol=1e-5), "single-pass mismatch"

    # --- Test 2: two-pass fallback path (ragged N and C tiles, affine) -----
    N2, DIM2 = 20, 200
    x2 = jax.random.normal(k2, (N2, DIM2), dtype=jnp.float32) * 1.5 - 0.3
    gamma2 = 0.5 + jax.random.uniform(k3, (DIM2,), dtype=jnp.float32)
    beta2 = jax.random.normal(k4, (DIM2,), dtype=jnp.float32)

    out2 = jax.block_until_ready(
        batch_norm_1d(x2, gamma2, beta2, force_two_pass=True))
    ref2 = _reference(x2, gamma2, beta2)
    assert out2.shape == (N2, DIM2)
    assert jnp.allclose(out2, ref2, atol=1e-4, rtol=1e-4), "two-pass mismatch"

    print("KERNEL_OK")
</pallas_src>

<mosaic_0001>
module attributes {stable_mosaic.version = 11 : i64} {
  func.func @_bn1d_kernel(%arg0: i32, %arg1: memref<16x32xf32, #tpu.memory_space<vmem>>, %arg2: memref<1x32xf32, #tpu.memory_space<vmem>>, %arg3: memref<1x32xf32, #tpu.memory_space<vmem>>, %arg4: memref<16x32xf32, #tpu.memory_space<vmem>>) attributes {dimension_semantics = [#tpu.dimension_semantics<parallel>], iteration_bounds = array<i64: 1>, scalar_prefetch = 0 : i64, scratch_operands = 0 : i64, tpu.core_type = #tpu.core_type<tc>, window_params = [{transform_indices = @transform_0, window_bounds = array<i64: 16, 32>}, {transform_indices = @transform_1, window_bounds = array<i64: 1, 32>}, {transform_indices = @transform_2, window_bounds = array<i64: 1, 32>}, {transform_indices = @transform_3, window_bounds = array<i64: 16, 32>}]} {
    %c0 = arith.constant 0 : index
    %c0_0 = arith.constant 0 : index
    %0 = vector.load %arg1[%c0, %c0_0] : memref<16x32xf32, #tpu.memory_space<vmem>>, vector<16x32xf32>
    %cst = arith.constant dense<0.000000e+00> : vector<32xf32>
    %1 = vector.multi_reduction <add>, %0, %cst [0] : vector<16x32xf32> to vector<32xf32>
    %2 = vector.shape_cast %1 : vector<32xf32> to vector<1x32xf32>
    %cst_1 = arith.constant 6.250000e-02 : f32
    %3 = vector.broadcast %cst_1 : f32 to vector<1x32xf32>
    %4 = arith.mulf %2, %3 : vector<1x32xf32>
    %c0_2 = arith.constant 0 : index
    %c0_3 = arith.constant 0 : index
    %5 = vector.load %arg1[%c0_2, %c0_3] : memref<16x32xf32, #tpu.memory_space<vmem>>, vector<16x32xf32>
    %6 = vector.broadcast %4 : vector<1x32xf32> to vector<16x32xf32>
    %7 = arith.subf %5, %6 : vector<16x32xf32>
    %8 = arith.mulf %7, %7 : vector<16x32xf32>
    %cst_4 = arith.constant dense<0.000000e+00> : vector<32xf32>
    %9 = vector.multi_reduction <add>, %8, %cst_4 [0] : vector<16x32xf32> to vector<32xf32>
    %10 = vector.shape_cast %9 : vector<32xf32> to vector<1x32xf32>
    %cst_5 = arith.constant 6.250000e-02 : f32
    %11 = vector.broadcast %cst_5 : f32 to vector<1x32xf32>
    %12 = arith.mulf %10, %11 : vector<1x32xf32>
    %cst_6 = arith.constant 9.99999974E-6 : f32
    %13 = vector.broadcast %cst_6 : f32 to vector<1x32xf32>
    %14 = arith.addf %12, %13 : vector<1x32xf32>
    %15 = math.rsqrt %14 : vector<1x32xf32>
    %c0_7 = arith.constant 0 : index
    %c0_8 = arith.constant 0 : index
    %16 = vector.load %arg2[%c0_7, %c0_8] : memref<1x32xf32, #tpu.memory_space<vmem>>, vector<1x32xf32>
    %17 = arith.mulf %15, %16 : vector<1x32xf32>
    %c0_9 = arith.constant 0 : index
    %c0_10 = arith.constant 0 : index
    %18 = vector.load %arg3[%c0_9, %c0_10] : memref<1x32xf32, #tpu.memory_space<vmem>>, vector<1x32xf32>
    %19 = arith.mulf %4, %17 : vector<1x32xf32>
    %20 = arith.subf %18, %19 : vector<1x32xf32>
    %c0_11 = arith.constant 0 : index
    %c0_12 = arith.constant 0 : index
    %21 = vector.load %arg1[%c0_11, %c0_12] : memref<16x32xf32, #tpu.memory_space<vmem>>, vector<16x32xf32>
    %22 = vector.broadcast %17 : vector<1x32xf32> to vector<16x32xf32>
    %23 = arith.mulf %21, %22 : vector<16x32xf32>
    %24 = vector.broadcast %20 : vector<1x32xf32> to vector<16x32xf32>
    %25 = arith.addf %23, %24 : vector<16x32xf32>
    %c0_13 = arith.constant 0 : index
    %c0_14 = arith.constant 0 : index
    %26 = vector.load %arg4[%c0_13, %c0_14] : memref<16x32xf32, #tpu.memory_space<vmem>>, vector<16x32xf32>
    tpu.vector_store %arg4[%c0_13, %c0_14], %25 {strides = array<i32>} : memref<16x32xf32, #tpu.memory_space<vmem>>, vector<16x32xf32>,
    return
  }
  func.func @transform_0(%arg0: i32) -> (i32, i32) {
    %c0_i32 = arith.constant 0 : i32
    %c0_i32_0 = arith.constant 0 : i32
    return %c0_i32, %arg0 : i32, i32
  }
  func.func @transform_1(%arg0: i32) -> (i32, i32) {
    %c0_i32 = arith.constant 0 : i32
    %c0_i32_0 = arith.constant 0 : i32
    return %c0_i32, %arg0 : i32, i32
  }
  func.func @transform_2(%arg0: i32) -> (i32, i32) {
    %c0_i32 = arith.constant 0 : i32
    %c0_i32_0 = arith.constant 0 : i32
    return %c0_i32, %arg0 : i32, i32
  }
  func.func @transform_3(%arg0: i32) -> (i32, i32) {
    %c0_i32 = arith.constant 0 : i32
    %c0_i32_0 = arith.constant 0 : i32
    return %c0_i32, %arg0 : i32, i32
  }
}

</mosaic_0001>

<llo_original>
// kernel: tpu_custom_call.1
$region0: #{tpu_custom_call.1}
  #allocation0 [shape = 'u32[]', space=smem, size = 0x4, offset = 0x4, fixed_abs, tag = 'smem constant byte address 0x4 - core index']
  #allocation1 [shape = 'u32[144,128]{1,0:T(1,128)}', space=vmem, size = 0x12000, scoped, tag = 'internal scratch']
  %s0 = inlined_call_operand.hbm [shape: f32[16,32], index: 0, kind: input, shape index: {}]
  %s1 = inlined_call_operand.vmem [shape: f32[1,32], index: 1, kind: input, shape index: {}]
  %s2 = inlined_call_operand.vmem [shape: f32[1,32], index: 2, kind: input, shape index: {}]
  %s3 = inlined_call_operand.hbm [shape: f32[16,32], index: 3, kind: output, shape index: {}]
  %s4 = sld [smem:[#allocation0]]
  $region26: #{tpu_custom_call.1} parent=0
    _
  %s6 = ssub.s32 1, %s4
  %s7 = scalar_select 0, %s6, %s4
  $region1: #{tpu_custom_call.1} parent=0
    #allocation2 [shape = 'u8[8192]{0}', space=vmem, size = 0x2000, scoped, tag = 'input window, operand 0, single buffered']
    #allocation3 [shape = 's32[1]{0}', space=sflag, size = 0x4, scoped, tag = 'scoped memory for tpu_custom_call.1']
    #allocation4 [shape = 's32[1]{0}', space=sflag, size = 0x4, scoped, tag = 'scoped memory for tpu_custom_call.1']
    #allocation5 [shape = 'u8[8192]{0}', space=vmem, size = 0x2000, scoped, tag = 'output window, operand 0, single buffered']
    %8 = vsyncpa [#allocation3], 0
    %9 = vsyncpa [#allocation4], 0
    // Predicated region
    $region2: #{tpu_custom_call.1} parent=1 // pred_check
      _
    $region3: #{tpu_custom_call.1} parent=1 // pred_check_branch
      %11 = sbr.rel (0) target = $region5
    $region4: #{tpu_custom_call.1} parent=1 // pred_region
      %s13 = ssub.s32 256, 256
      %14 = vsyncadd [#allocation3], %s13
      %s15 = sshll.u32 [#allocation2], 4
      %s16 = int_to_ptr.vmem [resolvable:$true] %s15
      %21 = dma.hbm_to_vmem [thread:$0]  %s0, 256, %s16, [#allocation3], 128, 128, 8
    $region5: #{tpu_custom_call.1} parent=1 // pred_fallthru
      _
    // Predicated region
    $region6: #{tpu_custom_call.1} parent=1 // pred_check
      _
    $region7: #{tpu_custom_call.1} parent=1 // pred_check_branch
      %23 = sbr.rel (0) target = $region9
    $region8: #{tpu_custom_call.1} parent=1 // pred_region
      _
    $region9: #{tpu_custom_call.1} parent=1 // pred_fallthru
      _
    // Predicated region
    $region10: #{tpu_custom_call.1} parent=1 // pred_check
      _
    $region11: #{tpu_custom_call.1} parent=1 // pred_check_branch
      %25 = sbr.rel (0) target = $region13
    $region12: #{tpu_custom_call.1} parent=1 // pred_region
      _
    $region13: #{tpu_custom_call.1} parent=1 // pred_fallthru
      _
    // Predicated region
    $region14: #{tpu_custom_call.1} parent=1 // pred_check
      _
    $region15: #{tpu_custom_call.1} parent=1 // pred_check_branch
      %27 = sbr.rel (0) target = $region17
    $region16: #{tpu_custom_call.1} parent=1 // pred_region
      %28 = dma.done [#allocation3], 256
    $region17: #{tpu_custom_call.1} parent=1 // pred_fallthru
      _
    %v29 = vld [vmem:[#allocation2] sm:$0xff]
    %v30 = vld [vmem:[#allocation2 + $0x8] sm:$0xff]
    %vm31 = vcmask 261120
    %v32 = vsel %vm31, %v29, 0.0
    %v33 = vsel %vm31, %v30, 0.0
    %v34 = vadd.f32 %v32, %v33
    %v35 = vrot.slane %v34, 4
    %v36 = vadd.f32 %v34, %v35
    %v37 = vrot.slane %v36, 2
    %v38 = vadd.f32 %v36, %v37
    %v39 = vrot.slane %v38, 1
    %v40 = vadd.f32 %v38, %v39
    %v41 = vmul.f32 %v40, 0.0625
    %v42 = vsub.f32 %v29, %v41
    %v43 = vsub.f32 %v30, %v41
    %v44 = vmul.f32 %v42, %v42
    %v45 = vmul.f32 %v43, %v43
    %v46 = vsel %vm31, %v44, 0.0
    %v47 = vsel %vm31, %v45, 0.0
    %v48 = vadd.f32 %v46, %v47
    %v49 = vrot.slane %v48, 4
    %v50 = vadd.f32 %v48, %v49
    %v51 = vrot.slane %v50, 2
    %v52 = vadd.f32 %v50, %v51
    %v53 = vrot.slane %v52, 1
    %v54 = vadd.f32 %v52, %v53
    %v55 = vmul.f32 %v54, 0.0625
    %v56 = vadd.f32 %v55, 1e-05
    %v57 = vrsqrt.pop %v56
    %v58 = vld [vmem:[%s1] sm:$0x1]
    %v59 = vmul.f32 %v57, %v58
    %v60 = vld [vmem:[%s2] sm:$0x1]
    %v61 = vmul.f32 %v41, %v59
    %v62 = vsub.f32 %v60, %v61
    %v63 = vlaneseq
    %v64 = vshrl.u32 %v63, 7
    %v65 = vsub.s32 0, %v64
    %v66 = vrot.slane %v59, %v65
    %v67 = vmul.f32 %v29, %v66
    %v68 = vmul.f32 %v30, %v66
    %v70 = vlaneseq
    %v71 = vshrl.u32 %v70, 7
    %v72 = vsub.s32 0, %v71
    %v73 = vrot.slane %v62, %v72
    %v75 = vadd.f32 %v67, %v73
    %v76 = vadd.f32 %v68, %v73
    %77 = vst.msk [vmem:[#allocation5] sm:$0xff] %vm31, %v75
    %78 = vst.msk [vmem:[#allocation5 + $0x8] sm:$0xff] %vm31, %v76
    // Predicated region
    $region18: #{tpu_custom_call.1} parent=1 // pred_check
      _
    $region19: #{tpu_custom_call.1} parent=1 // pred_check_branch
      %80 = sbr.rel (0) target = $region21
    $region20: #{tpu_custom_call.1} parent=1 // pred_region
      %s82 = ssub.s32 256, 256
      %83 = vsyncadd [#allocation4], %s82
      %s84 = sshll.u32 [#allocation5], 4
      %s85 = int_to_ptr.vmem [resolvable:$true] %s84
      %90 = dma.vmem_to_hbm [thread:$0]  %s85, 256, %s3, [#allocation4], 128, 128, 8
    $region21: #{tpu_custom_call.1} parent=1 // pred_fallthru
      _
    // Predicated region
    $region22: #{tpu_custom_call.1} parent=1 // pred_check
      _
    $region23: #{tpu_custom_call.1} parent=1 // pred_check_branch
      %92 = sbr.rel (0) target = $region25
    $region24: #{tpu_custom_call.1} parent=1 // pred_region
      %93 = dma.done [#allocation4], 256
    $region25: #{tpu_custom_call.1} parent=1 // pred_fallthru
      _
    %94 = vsyncpa [#allocation3], 1
    %95 = vsyncpa [#allocation4], 1

</llo_original>
